<compile_context>
chip_gen: v5e
topology: v5e:2x2
jax: 0.10.0
libtpu: 0.0.40
codegen_flags: <defaults>
</compile_context>

<pallas_src>
import functools

import jax
import jax.numpy as jnp
import numpy as np
from jax.experimental import pallas as pl
from jax.experimental.pallas import tpu as pltpu


def _center_loss_kernel(x_ref, labels_ref, out_ref, onehot_s, s2_acc, r_acc, *,
                        num_classes, nc_pad):
    """Feature-tiled kernel.

    x_ref:      (N, TF) float tile, VMEM (native dtype: f32 or bf16)
    labels_ref: (N, 1)  int32, VMEM (same block every grid step, resident)
    out_ref:    (1, 1)  float32 scalar loss, SMEM
    onehot_s:   (N, NC_pad) scratch in matmul dtype, built once at j==0
    s2_acc:     (NC_pad, 1) f32 scratch, accumulates sum_f S_c[f]^2
    r_acc:      (N, 1)      f32 scratch, accumulates per-sample ||x_i||^2
    """
    j = pl.program_id(0)
    n = x_ref.shape[0]

    @pl.when(j == 0)
    def _init():
        labels = labels_ref[...]                                      # (N, 1) i32
        cls_ids = jax.lax.broadcasted_iota(jnp.int32, (n, nc_pad), 1)
        # Mask padded / out-of-range class ids so they never contribute.
        onehot = (labels == cls_ids) & (cls_ids < num_classes)
        onehot_s[...] = onehot.astype(onehot_s.dtype)                 # (N, NC_pad)
        s2_acc[...] = jnp.zeros_like(s2_acc)
        r_acc[...] = jnp.zeros_like(r_acc)

    x = x_ref[...]                                                    # (N, TF) native dtype
    onehot = onehot_s[...]                                            # (N, NC_pad) native dtype

    dn = (((0,), (0,)), ((), ()))              # contract over the sample axis

    # Per-class feature sums for this tile: single native-dtype MXU pass with
    # f32 accumulation.  S_c[f] is complete (whole batch resident), so
    # squaring per tile and summing over tiles is exact.
    S = jax.lax.dot_general(onehot, x, dimension_numbers=dn,
                            preferred_element_type=jnp.float32)       # (NC_pad, TF) f32
    s2_acc[...] += jnp.sum(S * S, axis=1, keepdims=True)              # (NC_pad, 1)

    # Per-sample row sum-of-squares; square in f32 regardless of input dtype.
    xf = x.astype(jnp.float32)
    r_acc[...] += jnp.sum(xf * xf, axis=1, keepdims=True)             # (N, 1)

    @pl.when(j == pl.num_programs(0) - 1)
    def _finalize():
        oh = onehot_s[...].astype(jnp.float32)                        # (N, NC_pad)
        # A_c = sum_{i in c} ||x_i||^2  via one tiny contraction.
        a_c = jax.lax.dot_general(oh, r_acc[...], dimension_numbers=dn,
                                  preferred_element_type=jnp.float32)  # (NC_pad, 1)
        cnt = jax.lax.dot_general(oh, jnp.ones((n, 1), jnp.float32),
                                  dimension_numbers=dn,
                                  preferred_element_type=jnp.float32)  # (NC_pad, 1)
        inv = jnp.where(cnt > 0.5, 1.0 / jnp.maximum(cnt, 1.0), 0.0)
        # sum_{i in c} ||x_i - mean_c||^2 = A_c - ||S_c||^2 / cnt_c
        # (empty / padded classes give 0 - 0 = 0, contributing nothing)
        ssq = jnp.maximum(a_c - s2_acc[...] * inv, 0.0)
        total = jnp.sum(jnp.sqrt(ssq))
        out_ref[0, 0] = total / jnp.float32(num_classes)


def center_loss(x, labels, num_classes):
    """Pallas CenterLoss forward.  x: (N,C,H,W) or (N,C,P); labels: (N,)."""
    if x.ndim == 4:
        n, c, h, w = x.shape
        x = x.reshape(n, c * h, w)                 # 'n c h w -> n (c h) w'
    n = x.shape[0]
    # Keep f32 / bf16 native (bf16 feeds the MXU at native rate); anything
    # else is upcast to f32.  All accumulation inside the kernel is f32.
    if x.dtype != jnp.float32 and x.dtype != jnp.bfloat16:
        x = x.astype(jnp.float32)
    x_flat = x.reshape(n, -1)                      # (N, F) lane-dense slab
    f = x_flat.shape[1]
    itemsize = jnp.dtype(x_flat.dtype).itemsize

    # Generation-aware VMEM budget (v5e/v6e: 128 MiB, v7x: 64 MiB physical).
    try:
        vmem_cap = int(pltpu.get_tpu_info().vmem_capacity_bytes)
    except Exception:
        vmem_cap = 64 * 1024 * 1024                # conservative (v7x-sized)
    budget = max(vmem_cap // 2 - 16 * 1024 * 1024, 8 * 1024 * 1024)
    vmem_limit = min(vmem_cap - 16 * 1024 * 1024, budget + 16 * 1024 * 1024)
    vmem_limit = max(vmem_limit, 32 * 1024 * 1024)

    # Feature tile: largest lane-dense candidate whose double-buffered (N, TF)
    # input fits the budget (bigger tiles amortize per-grid-step overhead).
    f_round = ((max(f, 1) + 127) // 128) * 128
    tf = 128
    for cand in (2048, 1024, 512, 256, 128):
        if cand <= max(f_round, 128) and 2 * n * cand * itemsize <= budget:
            tf = cand
            break
    f_pad = ((max(f, 1) + tf - 1) // tf) * tf
    if f_pad != f:
        # Zero feature padding is inert for both S_c and the row-ssq.
        x_flat = jnp.pad(x_flat, ((0, 0), (0, f_pad - f)))

    labels_2d = labels.reshape(n, 1).astype(jnp.int32)       # (N, 1)
    nc_pad = max(8, ((num_classes + 7) // 8) * 8)             # sublane-pad classes

    kernel = functools.partial(_center_loss_kernel,
                               num_classes=num_classes, nc_pad=nc_pad)
    grid = (f_pad // tf,)

    out = pl.pallas_call(
        kernel,
        out_shape=jax.ShapeDtypeStruct((1, 1), jnp.float32),
        grid_spec=pltpu.PrefetchScalarGridSpec(
            num_scalar_prefetch=0,
            grid=grid,
            in_specs=[
                pl.BlockSpec((n, tf), lambda j: (0, j)),     # stream x over F
                pl.BlockSpec((n, 1), lambda j: (0, 0)),      # labels resident
            ],
            out_specs=pl.BlockSpec((1, 1), lambda j: (0, 0),
                                   memory_space=pltpu.SMEM),
            scratch_shapes=[
                pltpu.VMEM((n, nc_pad), x_flat.dtype),       # one-hot (built once)
                pltpu.VMEM((nc_pad, 1), jnp.float32),        # sum_f S_c[f]^2
                pltpu.VMEM((n, 1), jnp.float32),             # per-sample ||x_i||^2
            ],
        ),
        compiler_params=pltpu.CompilerParams(
            dimension_semantics=("arbitrary",),              # F axis is a reduction
            vmem_limit_bytes=int(vmem_limit),
        ),
    )(x_flat, labels_2d)
    return out[0, 0]


def _reference_center_loss(x, labels, num_classes):
    """NumPy reference mirroring the PyTorch module exactly (two-pass)."""
    x = np.asarray(x, dtype=np.float32)
    labels = np.asarray(labels)
    n, c, h, w = x.shape
    xf = x.reshape(n, c * h, w)
    centers = np.zeros((num_classes, c * h, w), dtype=np.float32)
    for cls in range(num_classes):
        idx = np.nonzero(labels == cls)[0]
        if len(idx) > 0:
            centers[cls] = xf[idx].mean(axis=0)
    distance = 0.0
    for cls in range(num_classes):
        idx = np.nonzero(labels == cls)[0]
        diff = xf[idx] - centers[cls]
        distance += np.sqrt(np.sum(diff * diff))
    return np.float32(distance / num_classes)


if __name__ == "__main__":
    num_classes = 4
    key = jax.random.PRNGKey(0)
    kx, kl = jax.random.split(key)

    # Small NCHW input consistent with the module's forward.
    x = jax.random.normal(kx, (8, 4, 16, 16), dtype=jnp.float32)
    labels = jax.random.randint(kl, (8,), 0, num_classes, dtype=jnp.int32)

    # f32 path.
    loss = jax.block_until_ready(center_loss(x, labels, num_classes))
    ref = _reference_center_loss(np.asarray(x), np.asarray(labels), num_classes)
    assert np.allclose(np.asarray(loss), ref, rtol=1e-3, atol=1e-5), (loss, ref)

    # bf16 path (native-rate MXU feed); compare against the reference computed
    # on the bf16-rounded inputs with a loose tolerance (identity + bf16 acc).
    x_bf16 = x.astype(jnp.bfloat16)
    loss_bf = jax.block_until_ready(center_loss(x_bf16, labels, num_classes))
    ref_bf = _reference_center_loss(
        np.asarray(x_bf16.astype(jnp.float32)), np.asarray(labels), num_classes)
    assert np.allclose(np.asarray(loss_bf), ref_bf, rtol=5e-2, atol=5e-2), (loss_bf, ref_bf)

    print("KERNEL_OK")
</pallas_src>

<mosaic_0001>
module attributes {stable_mosaic.version = 11 : i64} {
  func.func @_center_loss_kernel(%arg0: i32, %arg1: memref<8x1024xf32, #tpu.memory_space<vmem>>, %arg2: memref<8x1xi32, #tpu.memory_space<vmem>>, %arg3: memref<1x1xf32, #tpu.memory_space<smem>>, %arg4: memref<8x8xf32, #tpu.memory_space<vmem>>, %arg5: memref<8x1xf32, #tpu.memory_space<vmem>>, %arg6: memref<8x1xf32, #tpu.memory_space<vmem>>) attributes {dimension_semantics = [#tpu.dimension_semantics<arbitrary>], iteration_bounds = array<i64: 1>, scalar_prefetch = 0 : i64, scratch_operands = 3 : i64, tpu.core_type = #tpu.core_type<tc>, window_params = [{transform_indices = @transform_0, window_bounds = array<i64: 8, 1024>}, {pipeline_mode = #tpu.pipeline_mode<synchronous>, transform_indices = @transform_1, window_bounds = array<i64: 8, 1>}, {transform_indices = @transform_2, window_bounds = array<i64: 1, 1>}]} {
    %c0_i32 = arith.constant 0 : i32
    %0 = arith.cmpi eq, %arg0, %c0_i32 : i32
    %1 = arith.extui %0 : i1 to i32
    %c0_i32_0 = arith.constant 0 : i32
    %2 = arith.cmpi ne, %1, %c0_i32_0 : i32
    scf.if %2 {
      %c0_16 = arith.constant 0 : index
      %c0_17 = arith.constant 0 : index
      %21 = vector.load %arg2[%c0_16, %c0_17] : memref<8x1xi32, #tpu.memory_space<vmem>>, vector<8x1xi32>
      %22 = tpu.iota {dimensions = array<i32: 1>} : vector<8x8xi32>
      %23 = vector.broadcast %21 : vector<8x1xi32> to vector<8x8xi32>
      %24 = arith.cmpi eq, %23, %22 : vector<8x8xi32>
      %c4_i32 = arith.constant 4 : i32
      %25 = vector.broadcast %c4_i32 : i32 to vector<8x8xi32>
      %26 = arith.cmpi slt, %22, %25 : vector<8x8xi32>
      %27 = arith.andi %24, %26 : vector<8x8xi1>
      %28 = arith.extui %27 : vector<8x8xi1> to vector<8x8xi32>
      %29 = arith.sitofp %28 : vector<8x8xi32> to vector<8x8xf32>
      %c0_18 = arith.constant 0 : index
      %c0_19 = arith.constant 0 : index
      %30 = vector.load %arg4[%c0_18, %c0_19] : memref<8x8xf32, #tpu.memory_space<vmem>>, vector<8x8xf32>
      tpu.vector_store %arg4[%c0_18, %c0_19], %29 {strides = array<i32>} : memref<8x8xf32, #tpu.memory_space<vmem>>, vector<8x8xf32>,
      %cst_20 = arith.constant 0.000000e+00 : f32
      %31 = vector.broadcast %cst_20 : f32 to vector<8x1xf32>
      %c0_21 = arith.constant 0 : index
      %c0_22 = arith.constant 0 : index
      %32 = vector.load %arg5[%c0_21, %c0_22] : memref<8x1xf32, #tpu.memory_space<vmem>>, vector<8x1xf32>
      tpu.vector_store %arg5[%c0_21, %c0_22], %31 {strides = array<i32>} : memref<8x1xf32, #tpu.memory_space<vmem>>, vector<8x1xf32>,
      %cst_23 = arith.constant 0.000000e+00 : f32
      %33 = vector.broadcast %cst_23 : f32 to vector<8x1xf32>
      %c0_24 = arith.constant 0 : index
      %c0_25 = arith.constant 0 : index
      %34 = vector.load %arg6[%c0_24, %c0_25] : memref<8x1xf32, #tpu.memory_space<vmem>>, vector<8x1xf32>
      tpu.vector_store %arg6[%c0_24, %c0_25], %33 {strides = array<i32>} : memref<8x1xf32, #tpu.memory_space<vmem>>, vector<8x1xf32>,
    } else {
    }
    %c0 = arith.constant 0 : index
    %c0_1 = arith.constant 0 : index
    %3 = vector.load %arg1[%c0, %c0_1] : memref<8x1024xf32, #tpu.memory_space<vmem>>, vector<8x1024xf32>
    %c0_2 = arith.constant 0 : index
    %c0_3 = arith.constant 0 : index
    %4 = vector.load %arg4[%c0_2, %c0_3] : memref<8x8xf32, #tpu.memory_space<vmem>>, vector<8x8xf32>
    %cst = arith.constant dense<0.000000e+00> : vector<8x1024xf32>
    %5 = tpu.matmul %4, %3, %cst {dimension_numbers = #tpu.dot_dimension_numbers<[0], [0], [1], [1], [0, 1, 1, 1], [], []>} : vector<8x8xf32>, vector<8x1024xf32>, vector<8x1024xf32> -> vector<8x1024xf32>
    %c0_4 = arith.constant 0 : index
    %c0_5 = arith.constant 0 : index
    %6 = vector.load %arg5[%c0_4, %c0_5] : memref<8x1xf32, #tpu.memory_space<vmem>>, vector<8x1xf32>
    %7 = arith.mulf %5, %5 : vector<8x1024xf32>
    %cst_6 = arith.constant dense<0.000000e+00> : vector<8xf32>
    %8 = vector.multi_reduction <add>, %7, %cst_6 [1] : vector<8x1024xf32> to vector<8xf32>
    %9 = vector.shape_cast %8 : vector<8xf32> to vector<8x1xf32>
    %10 = arith.addf %6, %9 : vector<8x1xf32>
    %c0_7 = arith.constant 0 : index
    %c0_8 = arith.constant 0 : index
    %11 = vector.load %arg5[%c0_7, %c0_8] : memref<8x1xf32, #tpu.memory_space<vmem>>, vector<8x1xf32>
    tpu.vector_store %arg5[%c0_7, %c0_8], %10 {strides = array<i32>} : memref<8x1xf32, #tpu.memory_space<vmem>>, vector<8x1xf32>,
    %c0_9 = arith.constant 0 : index
    %c0_10 = arith.constant 0 : index
    %12 = vector.load %arg6[%c0_9, %c0_10] : memref<8x1xf32, #tpu.memory_space<vmem>>, vector<8x1xf32>
    %13 = arith.mulf %3, %3 : vector<8x1024xf32>
    %cst_11 = arith.constant dense<0.000000e+00> : vector<8xf32>
    %14 = vector.multi_reduction <add>, %13, %cst_11 [1] : vector<8x1024xf32> to vector<8xf32>
    %15 = vector.shape_cast %14 : vector<8xf32> to vector<8x1xf32>
    %16 = arith.addf %12, %15 : vector<8x1xf32>
    %c0_12 = arith.constant 0 : index
    %c0_13 = arith.constant 0 : index
    %17 = vector.load %arg6[%c0_12, %c0_13] : memref<8x1xf32, #tpu.memory_space<vmem>>, vector<8x1xf32>
    tpu.vector_store %arg6[%c0_12, %c0_13], %16 {strides = array<i32>} : memref<8x1xf32, #tpu.memory_space<vmem>>, vector<8x1xf32>,
    %c0_i32_14 = arith.constant 0 : i32
    %18 = arith.cmpi eq, %arg0, %c0_i32_14 : i32
    %19 = arith.extui %18 : i1 to i32
    %c0_i32_15 = arith.constant 0 : i32
    %20 = arith.cmpi ne, %19, %c0_i32_15 : i32
    scf.if %20 {
      %c0_16 = arith.constant 0 : index
      %c0_17 = arith.constant 0 : index
      %21 = vector.load %arg4[%c0_16, %c0_17] : memref<8x8xf32, #tpu.memory_space<vmem>>, vector<8x8xf32>
      %c0_18 = arith.constant 0 : index
      %c0_19 = arith.constant 0 : index
      %22 = vector.load %arg6[%c0_18, %c0_19] : memref<8x1xf32, #tpu.memory_space<vmem>>, vector<8x1xf32>
      %cst_20 = arith.constant dense<0.000000e+00> : vector<8x1xf32>
      %23 = tpu.matmul %21, %22, %cst_20 {dimension_numbers = #tpu.dot_dimension_numbers<[0], [0], [1], [1], [0, 1, 1, 1], [], []>} : vector<8x8xf32>, vector<8x1xf32>, vector<8x1xf32> -> vector<8x1xf32>
      %cst_21 = arith.constant 1.000000e+00 : f32
      %24 = vector.broadcast %cst_21 : f32 to vector<8x1xf32>
      %cst_22 = arith.constant dense<0.000000e+00> : vector<8x1xf32>
      %25 = tpu.matmul %21, %24, %cst_22 {dimension_numbers = #tpu.dot_dimension_numbers<[0], [0], [1], [1], [0, 1, 1, 1], [], []>} : vector<8x8xf32>, vector<8x1xf32>, vector<8x1xf32> -> vector<8x1xf32>
      %cst_23 = arith.constant 5.000000e-01 : f32
      %26 = vector.broadcast %cst_23 : f32 to vector<8x1xf32>
      %27 = arith.cmpf ogt, %25, %26 : vector<8x1xf32>
      %cst_24 = arith.constant 1.000000e+00 : f32
      %28 = vector.broadcast %cst_24 : f32 to vector<8x1xf32>
      %29 = arith.maximumf %25, %28 : vector<8x1xf32>
      %cst_25 = arith.constant 1.000000e+00 : f32
      %30 = vector.broadcast %cst_25 : f32 to vector<8x1xf32>
      %31 = arith.divf %30, %29 : vector<8x1xf32>
      %cst_26 = arith.constant 0.000000e+00 : f32
      %32 = vector.broadcast %cst_26 : f32 to vector<8x1xf32>
      %33 = arith.select %27, %31, %32 : vector<8x1xi1>, vector<8x1xf32>
      %c0_27 = arith.constant 0 : index
      %c0_28 = arith.constant 0 : index
      %34 = vector.load %arg5[%c0_27, %c0_28] : memref<8x1xf32, #tpu.memory_space<vmem>>, vector<8x1xf32>
      %35 = arith.mulf %34, %33 : vector<8x1xf32>
      %36 = arith.subf %23, %35 : vector<8x1xf32>
      %cst_29 = arith.constant 0.000000e+00 : f32
      %37 = vector.broadcast %cst_29 : f32 to vector<8x1xf32>
      %38 = arith.maximumf %36, %37 : vector<8x1xf32>
      %39 = math.sqrt %38 : vector<8x1xf32>
      %40 = vector.shape_cast %39 : vector<8x1xf32> to vector<1x8x1xf32>
      %cst_30 = arith.constant dense<0.000000e+00> : vector<1xf32>
      %41 = vector.multi_reduction <add>, %40, %cst_30 [1, 2] : vector<1x8x1xf32> to vector<1xf32>
      %42 = vector.shape_cast %41 : vector<1xf32> to vector<1x1x1xf32>
      %43 = vector.extract %42[0, 0, 0] : f32 from vector<1x1x1xf32>
      %cst_31 = arith.constant 4.000000e+00 : f32
      %44 = arith.divf %43, %cst_31 : f32
      %c0_32 = arith.constant 0 : index
      %c0_33 = arith.constant 0 : index
      %45 = memref.load %arg3[%c0_32, %c0_33] : memref<1x1xf32, #tpu.memory_space<smem>>
      memref.store %44, %arg3[%c0_32, %c0_33] : memref<1x1xf32, #tpu.memory_space<smem>>
    } else {
    }
    return
  }
  func.func @transform_0(%arg0: i32) -> (i32, i32) {
    %c0_i32 = arith.constant 0 : i32
    %c0_i32_0 = arith.constant 0 : i32
    return %c0_i32, %arg0 : i32, i32
  }
  func.func @transform_1(%arg0: i32) -> (i32, i32) {
    %c0_i32 = arith.constant 0 : i32
    %c0_i32_0 = arith.constant 0 : i32
    %c0_i32_1 = arith.constant 0 : i32
    return %c0_i32, %c0_i32_0 : i32, i32
  }
  func.func @transform_2(%arg0: i32) -> (i32, i32) {
    %c0_i32 = arith.constant 0 : i32
    %c0_i32_0 = arith.constant 0 : i32
    %c0_i32_1 = arith.constant 0 : i32
    return %c0_i32, %c0_i32_0 : i32, i32
  }
}

</mosaic_0001>

<llo_original>
// kernel: tpu_custom_call.1
$region0: #{tpu_custom_call.1}
  #allocation0 [shape = 'u32[]', space=smem, size = 0x4, offset = 0x4, fixed_abs, tag = 'smem constant byte address 0x4 - core index']
  #allocation1 [shape = 'u32[72,128]{1,0:T(1,128)}', space=vmem, size = 0x9000, scoped, tag = 'internal scratch']
  #allocation2 [shape = 'f32[8,8]{1,0:T(8,128)}', space=vmem, size = 0x1000, scoped, tag = 'scratch operand']
  #allocation3 [shape = 'f32[8,1]{1,0:T(8,128)}', space=vmem, size = 0x1000, scoped, tag = 'scratch operand']
  #allocation4 [shape = 'f32[8,1]{1,0:T(8,128)}', space=vmem, size = 0x1000, scoped, tag = 'scratch operand']
  %s0 = inlined_call_operand.hbm [shape: f32[8,1024], index: 0, kind: input, shape index: {}]
  %s1 = inlined_call_operand.vmem [shape: s32[8,1], index: 1, kind: input, shape index: {}]
  %s2 = inlined_call_operand.hbm [shape: f32[1,1], index: 2, kind: output, shape index: {}]
  %s3 = sld [smem:[#allocation0]]
  $region30: #{tpu_custom_call.1} parent=0
    _
  %s5 = ssub.s32 1, %s3
  %s6 = scalar_select 0, %s5, %s3
  $region1: #{tpu_custom_call.1} parent=0
    #allocation5 [shape = 'u8[32768]{0}', space=vmem, size = 0x8000, scoped, tag = 'input window, operand 0, single buffered']
    #allocation6 [shape = 's32[1]{0}', space=sflag, size = 0x4, scoped, tag = 'scoped memory for tpu_custom_call.1']
    #allocation7 [shape = 's32[1]{0}', space=sflag, size = 0x4, scoped, tag = 'scoped memory for tpu_custom_call.1']
    #allocation8 [shape = 'u8[512]{0}', space=smem, size = 0x200, scoped, tag = 'output window, operand 0, single buffered']
    %7 = vsyncpa [#allocation6], 0
    %8 = vsyncpa [#allocation7], 0
    // Predicated region
    $region2: #{tpu_custom_call.1} parent=1 // pred_check
      _
    $region3: #{tpu_custom_call.1} parent=1 // pred_check_branch
      %10 = sbr.rel (0) target = $region5
    $region4: #{tpu_custom_call.1} parent=1 // pred_region
      %12 = vsyncadd [#allocation6], 0
      %s14 = sshll.u32 %s0, 4
      %s15 = int_to_ptr.hbm [resolvable:$true] %s14
      %s16 = sshll.u32 [#allocation5], 4
      %s17 = int_to_ptr.vmem [resolvable:$true] %s16
      %19 = dma.hbm_to_vmem [thread:$0]  %s15, 1024, %s17, [#allocation6]
    $region5: #{tpu_custom_call.1} parent=1 // pred_fallthru
      _
    // Predicated region
    $region6: #{tpu_custom_call.1} parent=1 // pred_check
      _
    $region7: #{tpu_custom_call.1} parent=1 // pred_check_branch
      %21 = sbr.rel (0) target = $region9
    $region8: #{tpu_custom_call.1} parent=1 // pred_region
      _
    $region9: #{tpu_custom_call.1} parent=1 // pred_fallthru
      _
    // Predicated region
    $region10: #{tpu_custom_call.1} parent=1 // pred_check
      _
    $region11: #{tpu_custom_call.1} parent=1 // pred_check_branch
      %23 = sbr.rel (0) target = $region13
    $region12: #{tpu_custom_call.1} parent=1 // pred_region
      %25 = dma.done [#allocation6], 1024
    $region13: #{tpu_custom_call.1} parent=1 // pred_fallthru
      _
    %p26 = scmp.eq.s32.totalorder 0, 0
    // Predicated region
    $region14: #{tpu_custom_call.1} parent=1 // pred_check
      %p27 = pneg %p26
    $region15: #{tpu_custom_call.1} parent=1 // pred_check_branch
      %29 = sbr.rel (%p27) target = $region17
    $region16: #{tpu_custom_call.1} parent=1 // pred_region
      %v30 = vld [vmem:[%s1] sm:$0xff]
      %v31 = vlaneseq
      %v32 = vand.u32 %v31, 127
      %33 = vset.pattern.permute.xlu0 0
      %34 = vperm.xlu0 %33, %v30
      %v35 = vpop.permute.xlu0 %34
      %vm36 = vcmp.eq.s32.totalorder %v35, %v32
      %vm37 = vcmp.lt.s32.totalorder %v32, 4
      %vm38 = vmand %vm36, %vm37
      %v39 = vsel %vm38, 1, 0
      %v40 = vcvt.s32.f32 %v39
      %vm41 = vcmask 64512
      %42 = vst.msk [vmem:[#allocation2] sm:$0xff] %vm41, %v40
      %vm43 = vcmask 7168
      %44 = vst.msk [vmem:[#allocation3] sm:$0xff] %vm43, 0.0
      %45 = vst.msk [vmem:[#allocation4] sm:$0xff] %vm43, 0.0
    $region17: #{tpu_custom_call.1} parent=1 // pred_fallthru
      _
    %v46 = vld [vmem:[#allocation5] sm:$0xff]
    %v47 = vld [vmem:[#allocation5 + $0x8] sm:$0xff]
    %v48 = vld [vmem:[#allocation5 + $0x10] sm:$0xff]
    %v49 = vld [vmem:[#allocation5 + $0x18] sm:$0xff]
    %v50 = vld [vmem:[#allocation5 + $0x20] sm:$0xff]
    %v51 = vld [vmem:[#allocation5 + $0x28] sm:$0xff]
    %v52 = vld [vmem:[#allocation5 + $0x30] sm:$0xff]
    %v53 = vld [vmem:[#allocation5 + $0x38] sm:$0xff]
    %v54 = vld [vmem:[#allocation2] sm:$0xff]
    %55 = vxpose.xlu0.b32.start [1/16] %v54, 128
    %56 = vxpose.xlu0.b32.cont [2/16] 0.0, 128
    %57 = vxpose.xlu0.b32.cont [3/16] 0.0, 128
    %58 = vxpose.xlu0.b32.cont [4/16] 0.0, 128
    %59 = vxpose.xlu0.b32.cont [5/16] 0.0, 128
    %60 = vxpose.xlu0.b32.cont [6/16] 0.0, 128
    %61 = vxpose.xlu0.b32.cont [7/16] 0.0, 128
    %62 = vxpose.xlu0.b32.cont [8/16] 0.0, 128
    %63 = vxpose.xlu0.b32.cont [9/16] 0.0, 128
    %64 = vxpose.xlu0.b32.cont [10/16] 0.0, 128
    %65 = vxpose.xlu0.b32.cont [11/16] 0.0, 128
    %66 = vxpose.xlu0.b32.cont [12/16] 0.0, 128
    %67 = vxpose.xlu0.b32.cont [13/16] 0.0, 128
    %68 = vxpose.xlu0.b32.cont [14/16] 0.0, 128
    %69 = vxpose.xlu0.b32.cont [15/16] 0.0, 128
    %70 = vxpose.xlu0.b32.end [16/16] 0.0, 128
    %v71 = vpop.trf.xlu0
    %v72 = vpop.trf.xlu0
    %v73 = vpop.trf.xlu0
    %v74 = vpop.trf.xlu0
    %v75 = vpop.trf.xlu0
    %v76 = vpop.trf.xlu0
    %v77 = vpop.trf.xlu0
    %v78 = vpop.trf.xlu0
    %v79 = vpop.trf.xlu0
    %v80 = vpop.trf.xlu0
    %v81 = vpop.trf.xlu0
    %v82 = vpop.trf.xlu0
    %v83 = vpop.trf.xlu0
    %v84 = vpop.trf.xlu0
    %v85 = vpop.trf.xlu0
    %v86 = vpop.trf.xlu0
    %vm87 = vcmask 64512
    %v89 = vsel %vm87, %v71, 0
    %91 = vmatpush.msra.mxu0 0.0
    %92 = vmatpush.msra.mxu0 0.0
    %93 = vmatpush.msra.mxu0 0.0
    %94 = vmatpush.msra.mxu0 0.0
    %95 = vmatpush.msra.mxu0 0.0
    %96 = vmatpush.msra.mxu0 0.0
    %97 = vmatpush.msra.mxu0 0.0
    %98 = vmatpush.msra.mxu0 0.0
    %99 = vmatpush.msra.mxu0 0.0
    %100 = vmatpush.msra.mxu0 0.0
    %101 = vmatpush.msra.mxu0 0.0
    %102 = vmatpush.msra.mxu0 0.0
    %103 = vmatpush.msra.mxu0 0.0
    %104 = vmatpush.msra.mxu0 0.0
    %105 = vmatpush.msra.mxu0 0.0
    %106 = vmatpush.msra.mxu0 %v46
    %107 = vmatmul.f32.gmra.mxu0 %v89
    %v108 = vpop.f32.mrf.mxu0
    %v109 = vadd.f32 0.0, %v108
    %110 = vdwg.mxu0
    %111 = vmatpush.msra.mxu0 0.0
    %112 = vmatpush.msra.mxu0 0.0
    %113 = vmatpush.msra.mxu0 0.0
    %114 = vmatpush.msra.mxu0 0.0
    %115 = vmatpush.msra.mxu0 0.0
    %116 = vmatpush.msra.mxu0 0.0
    %117 = vmatpush.msra.mxu0 0.0
    %118 = vmatpush.msra.mxu0 0.0
    %119 = vmatpush.msra.mxu0 0.0
    %120 = vmatpush.msra.mxu0 0.0
    %121 = vmatpush.msra.mxu0 0.0
    %122 = vmatpush.msra.mxu0 0.0
    %123 = vmatpush.msra.mxu0 0.0
    %124 = vmatpush.msra.mxu0 0.0
    %125 = vmatpush.msra.mxu0 0.0
    %126 = vmatpush.msra.mxu0 %v47
    %127 = vmatmul.f32.gmra.mxu0 %v89
    %v128 = vpop.f32.mrf.mxu0
    %v129 = vadd.f32 0.0, %v128
    %130 = vdwg.mxu0
    %131 = vmatpush.msra.mxu0 0.0
    %132 = vmatpush.msra.mxu0 0.0
    %133 = vmatpush.msra.mxu0 0.0
    %134 = vmatpush.msra.mxu0 0.0
    %135 = vmatpush.msra.mxu0 0.0
    %136 = vmatpush.msra.mxu0 0.0
    %137 = vmatpush.msra.mxu0 0.0
    %138 = vmatpush.msra.mxu0 0.0
    %139 = vmatpush.msra.mxu0 0.0
    %140 = vmatpush.msra.mxu0 0.0
    %141 = vmatpush.msra.mxu0 0.0
    %142 = vmatpush.msra.mxu0 0.0
    %143 = vmatpush.msra.mxu0 0.0
    %144 = vmatpush.msra.mxu0 0.0
    %145 = vmatpush.msra.mxu0 0.0
    %146 = vmatpush.msra.mxu0 %v48
    %147 = vmatmul.f32.gmra.mxu0 %v89
    %v148 = vpop.f32.mrf.mxu0
    %v149 = vadd.f32 0.0, %v148
    %150 = vdwg.mxu0
    %151 = vmatpush.msra.mxu0 0.0
    %152 = vmatpush.msra.mxu0 0.0
    %153 = vmatpush.msra.mxu0 0.0
    %154 = vmatpush.msra.mxu0 0.0
    %155 = vmatpush.msra.mxu0 0.0
    %156 = vmatpush.msra.mxu0 0.0
    %157 = vmatpush.msra.mxu0 0.0
    %158 = vmatpush.msra.mxu0 0.0
    %159 = vmatpush.msra.mxu0 0.0
    %160 = vmatpush.msra.mxu0 0.0
    %161 = vmatpush.msra.mxu0 0.0
    %162 = vmatpush.msra.mxu0 0.0
    %163 = vmatpush.msra.mxu0 0.0
    %164 = vmatpush.msra.mxu0 0.0
    %165 = vmatpush.msra.mxu0 0.0
    %166 = vmatpush.msra.mxu0 %v49
    %167 = vmatmul.f32.gmra.mxu0 %v89
    %v168 = vpop.f32.mrf.mxu0
    %v169 = vadd.f32 0.0, %v168
    %170 = vdwg.mxu0
    %171 = vmatpush.msra.mxu0 0.0
    %172 = vmatpush.msra.mxu0 0.0
    %173 = vmatpush.msra.mxu0 0.0
    %174 = vmatpush.msra.mxu0 0.0
    %175 = vmatpush.msra.mxu0 0.0
    %176 = vmatpush.msra.mxu0 0.0
    %177 = vmatpush.msra.mxu0 0.0
    %178 = vmatpush.msra.mxu0 0.0
    %179 = vmatpush.msra.mxu0 0.0
    %180 = vmatpush.msra.mxu0 0.0
    %181 = vmatpush.msra.mxu0 0.0
    %182 = vmatpush.msra.mxu0 0.0
    %183 = vmatpush.msra.mxu0 0.0
    %184 = vmatpush.msra.mxu0 0.0
    %185 = vmatpush.msra.mxu0 0.0
    %186 = vmatpush.msra.mxu0 %v50
    %187 = vmatmul.f32.gmra.mxu0 %v89
    %v188 = vpop.f32.mrf.mxu0
    %v189 = vadd.f32 0.0, %v188
    %190 = vdwg.mxu0
    %191 = vmatpush.msra.mxu0 0.0
    %192 = vmatpush.msra.mxu0 0.0
    %193 = vmatpush.msra.mxu0 0.0
    %194 = vmatpush.msra.mxu0 0.0
    %195 = vmatpush.msra.mxu0 0.0
    %196 = vmatpush.msra.mxu0 0.0
    %197 = vmatpush.msra.mxu0 0.0
    %198 = vmatpush.msra.mxu0 0.0
    %199 = vmatpush.msra.mxu0 0.0
    %200 = vmatpush.msra.mxu0 0.0
    %201 = vmatpush.msra.mxu0 0.0
    %202 = vmatpush.msra.mxu0 0.0
    %203 = vmatpush.msra.mxu0 0.0
    %204 = vmatpush.msra.mxu0 0.0
    %205 = vmatpush.msra.mxu0 0.0
    %206 = vmatpush.msra.mxu0 %v51
    %207 = vmatmul.f32.gmra.mxu0 %v89
    %v208 = vpop.f32.mrf.mxu0
    %v209 = vadd.f32 0.0, %v208
    %210 = vdwg.mxu0
    %211 = vmatpush.msra.mxu0 0.0
    %212 = vmatpush.msra.mxu0 0.0
    %213 = vmatpush.msra.mxu0 0.0
    %214 = vmatpush.msra.mxu0 0.0
    %215 = vmatpush.msra.mxu0 0.0
    %216 = vmatpush.msra.mxu0 0.0
    %217 = vmatpush.msra.mxu0 0.0
    %218 = vmatpush.msra.mxu0 0.0
    %219 = vmatpush.msra.mxu0 0.0
    %220 = vmatpush.msra.mxu0 0.0
    %221 = vmatpush.msra.mxu0 0.0
    %222 = vmatpush.msra.mxu0 0.0
    %223 = vmatpush.msra.mxu0 0.0
    %224 = vmatpush.msra.mxu0 0.0
    %225 = vmatpush.msra.mxu0 0.0
    %226 = vmatpush.msra.mxu0 %v52
    %227 = vmatmul.f32.gmra.mxu0 %v89
    %v228 = vpop.f32.mrf.mxu0
    %v229 = vadd.f32 0.0, %v228
    %230 = vdwg.mxu0
    %231 = vmatpush.msra.mxu0 0.0
    %232 = vmatpush.msra.mxu0 0.0
    %233 = vmatpush.msra.mxu0 0.0
    %234 = vmatpush.msra.mxu0 0.0
    %235 = vmatpush.msra.mxu0 0.0
    %236 = vmatpush.msra.mxu0 0.0
    %237 = vmatpush.msra.mxu0 0.0
    %238 = vmatpush.msra.mxu0 0.0
    %239 = vmatpush.msra.mxu0 0.0
    %240 = vmatpush.msra.mxu0 0.0
    %241 = vmatpush.msra.mxu0 0.0
    %242 = vmatpush.msra.mxu0 0.0
    %243 = vmatpush.msra.mxu0 0.0
    %244 = vmatpush.msra.mxu0 0.0
    %245 = vmatpush.msra.mxu0 0.0
    %246 = vmatpush.msra.mxu0 %v53
    %247 = vmatmul.f32.gmra.mxu0 %v89
    %v248 = vpop.f32.mrf.mxu0
    %v249 = vadd.f32 0.0, %v248
    %250 = vdwg.mxu0
    %v251 = vld [vmem:[#allocation3] sm:$0xff]
    %v252 = vmul.f32 %v109, %v109
    %v253 = vmul.f32 %v129, %v129
    %v254 = vmul.f32 %v149, %v149
    %v255 = vmul.f32 %v169, %v169
    %v256 = vmul.f32 %v189, %v189
    %v257 = vmul.f32 %v209, %v209
    %v258 = vmul.f32 %v229, %v229
    %v259 = vmul.f32 %v249, %v249
    %v260 = vadd.f32 %v252, %v253
    %v261 = vadd.f32 %v260, %v254
    %v262 = vadd.f32 %v261, %v255
    %v263 = vadd.f32 %v262, %v256
    %v264 = vadd.f32 %v263, %v257
    %v265 = vadd.f32 %v264, %v258
    %v266 = vadd.f32 %v265, %v259
    %267 = vadd.xlane.f32.xlu0 %v266
    %v268 = vpop.xlane.xlu0 %267
    %v269 = vadd.f32 %v251, %v268
    %vm270 = vcmask 7168
    %271 = vst.msk [vmem:[#allocation3] sm:$0xff] %vm270, %v269
    %v272 = vld [vmem:[#allocation4] sm:$0xff]
    %v273 = vmul.f32 %v46, %v46
    %v274 = vmul.f32 %v47, %v47
    %v275 = vmul.f32 %v48, %v48
    %v276 = vmul.f32 %v49, %v49
    %v277 = vmul.f32 %v50, %v50
    %v278 = vmul.f32 %v51, %v51
    %v279 = vmul.f32 %v52, %v52
    %v280 = vmul.f32 %v53, %v53
    %v281 = vadd.f32 %v273, %v274
    %v282 = vadd.f32 %v281, %v275
    %v283 = vadd.f32 %v282, %v276
    %v284 = vadd.f32 %v283, %v277
    %v285 = vadd.f32 %v284, %v278
    %v286 = vadd.f32 %v285, %v279
    %v287 = vadd.f32 %v286, %v280
    %288 = vadd.xlane.f32.xlu0 %v287
    %v289 = vpop.xlane.xlu0 %288
    %v290 = vadd.f32 %v272, %v289
    %291 = vst.msk [vmem:[#allocation4] sm:$0xff] %vm270, %v290
    // Predicated region
    $region18: #{tpu_custom_call.1} parent=1 // pred_check
      %p292 = pneg %p26
    $region19: #{tpu_custom_call.1} parent=1 // pred_check_branch
      %294 = sbr.rel (%p292) target = $region21
    $region20: #{tpu_custom_call.1} parent=1 // pred_region
      %v295 = vld [vmem:[#allocation2] sm:$0xff]
      %v296 = vld [vmem:[#allocation4] sm:$0xff]
      %297 = vxpose.xlu0.b32.start [1/16] %v295, 128
      %298 = vxpose.xlu0.b32.cont [2/16] 0.0, 128
      %299 = vxpose.xlu0.b32.cont [3/16] 0.0, 128
      %300 = vxpose.xlu0.b32.cont [4/16] 0.0, 128
      %301 = vxpose.xlu0.b32.cont [5/16] 0.0, 128
      %302 = vxpose.xlu0.b32.cont [6/16] 0.0, 128
      %303 = vxpose.xlu0.b32.cont [7/16] 0.0, 128
      %304 = vxpose.xlu0.b32.cont [8/16] 0.0, 128
      %305 = vxpose.xlu0.b32.cont [9/16] 0.0, 128
      %306 = vxpose.xlu0.b32.cont [10/16] 0.0, 128
      %307 = vxpose.xlu0.b32.cont [11/16] 0.0, 128
      %308 = vxpose.xlu0.b32.cont [12/16] 0.0, 128
      %309 = vxpose.xlu0.b32.cont [13/16] 0.0, 128
      %310 = vxpose.xlu0.b32.cont [14/16] 0.0, 128
      %311 = vxpose.xlu0.b32.cont [15/16] 0.0, 128
      %312 = vxpose.xlu0.b32.end [16/16] 0.0, 128
      %v313 = vpop.trf.xlu0
      %v314 = vpop.trf.xlu0
      %v315 = vpop.trf.xlu0
      %v316 = vpop.trf.xlu0
      %v317 = vpop.trf.xlu0
      %v318 = vpop.trf.xlu0
      %v319 = vpop.trf.xlu0
      %v320 = vpop.trf.xlu0
      %v321 = vpop.trf.xlu0
      %v322 = vpop.trf.xlu0
      %v323 = vpop.trf.xlu0
      %v324 = vpop.trf.xlu0
      %v325 = vpop.trf.xlu0
      %v326 = vpop.trf.xlu0
      %v327 = vpop.trf.xlu0
      %v328 = vpop.trf.xlu0
      %v330 = vsel %vm87, %v313, 0
      %332 = vmatpush.msra.mxu0 0.0
      %333 = vmatpush.msra.mxu0 0.0
      %334 = vmatpush.msra.mxu0 0.0
      %335 = vmatpush.msra.mxu0 0.0
      %336 = vmatpush.msra.mxu0 0.0
      %337 = vmatpush.msra.mxu0 0.0
      %338 = vmatpush.msra.mxu0 0.0
      %339 = vmatpush.msra.mxu0 0.0
      %340 = vmatpush.msra.mxu0 0.0
      %341 = vmatpush.msra.mxu0 0.0
      %342 = vmatpush.msra.mxu0 0.0
      %343 = vmatpush.msra.mxu0 0.0
      %344 = vmatpush.msra.mxu0 0.0
      %345 = vmatpush.msra.mxu0 0.0
      %346 = vmatpush.msra.mxu0 0.0
      %347 = vmatpush.msra.mxu0 %v296
      %348 = vmatmul.f32.gmra.mxu0 %v330
      %v349 = vpop.f32.mrf.mxu0
      %v350 = vadd.f32 0.0, %v349
      %351 = vdwg.mxu0
      %352 = vmatpush.msra.mxu0 0.0
      %353 = vmatpush.msra.mxu0 0.0
      %354 = vmatpush.msra.mxu0 0.0
      %355 = vmatpush.msra.mxu0 0.0
      %356 = vmatpush.msra.mxu0 0.0
      %357 = vmatpush.msra.mxu0 0.0
      %358 = vmatpush.msra.mxu0 0.0
      %359 = vmatpush.msra.mxu0 0.0
      %360 = vmatpush.msra.mxu0 0.0
      %361 = vmatpush.msra.mxu0 0.0
      %362 = vmatpush.msra.mxu0 0.0
      %363 = vmatpush.msra.mxu0 0.0
      %364 = vmatpush.msra.mxu0 0.0
      %365 = vmatpush.msra.mxu0 0.0
      %366 = vmatpush.msra.mxu0 0.0
      %367 = vmatpush.msra.mxu0 1.0
      %368 = vmatmul.f32.gmra.mxu0 %v330
      %v369 = vpop.f32.mrf.mxu0
      %v370 = vadd.f32 0.0, %v369
      %371 = vdwg.mxu0
      %vm372 = vcmp.gt.f32.partialorder %v370, 0.5
      %v373 = vmax.f32 %v370, 1.0
      %v374 = vrcp.pop %v373
      %v375 = vmul.f32 %v373, %v374
      %v376 = vsub.f32 1.0, %v375
      %v377 = vmul.f32 %v374, %v376
      %v378 = vadd.f32 %v374, %v377
      %vm379 = vweird.f32 %v373
      %vm380 = vweird.f32 %v374
      %vm381 = vmor %vm379, %vm380
      %v382 = vsel %vm381, %v374, %v378
      %v383 = vand.u32 2147483647, %v373
      %vm384 = vcmp.eq.f32.partialorder %v383, 8.507059e+37
      %v385 = vand.u32 %v373, 2147483648
      %v386 = vor.u32 1.1754944e-38, %v385
      %v387 = vsel %vm384, %v386, %v382
      %v388 = vmul.f32 1.0, %v387
      %v389 = vsel %vm372, %v388, 0.0
      %v390 = vld [vmem:[#allocation3] sm:$0xff]
      %v391 = vmul.f32 %v390, %v389
      %v392 = vsub.f32 %v350, %v391
      %v393 = vmax.f32 %v392, 0.0
      %v394 = vrsqrt.pop %v393
      %v395 = vmul.f32 %v394, %v393
      %v396 = vmul.f32 %v395, %v394
      %v397 = vmul.f32 0.5, %v396
      %v398 = vsub.f32 1.5, %v397
      %v399 = vmul.f32 %v394, %v398
      %v400 = vmul.f32 %v393, %v399
      %vm401 = vcmp.eq.f32.partialorder %v393, inf
      %v402 = vsel %vm401, %v393, %v400
      %vm403 = vcmp.eq.f32.partialorder %v393, 0.0
      %v404 = vand.u32 %v393, 2147483648
      %v405 = vsel %vm403, %v404, %v402
      %v406 = vsel %vm270, %v405, 0.0
      %407 = vadd.xlane.f32.xlu0 %v406
      %v408 = vpop.xlane.xlu0 %407
      %v409 = vrot.slane %v408, 4
      %v410 = vadd.f32 %v408, %v409
      %v411 = vrot.slane %v410, 2
      %v412 = vadd.f32 %v410, %v411
      %v413 = vrot.slane %v412, 1
      %v414 = vadd.f32 %v412, %v413
      %s415 = vtos %v414
      %v416 = vrcp.pop 4.0
      %v417 = vmul.f32 4.0, %v416
      %v418 = vsub.f32 1.0, %v417
      %v419 = vmul.f32 %v416, %v418
      %v420 = vadd.f32 %v416, %v419
      %vm421 = vweird.f32 %v416
      %v422 = vsel %vm421, %v416, %v420
      %s423 = vtos %v422
      %s424 = smul.f32 %s415, %s423
      %s425 = scalar_lea.smem [#allocation8], 0
      %426 = sst [smem:[%s425]] %s424
    $region21: #{tpu_custom_call.1} parent=1 // pred_fallthru
      _
    // Predicated region
    $region22: #{tpu_custom_call.1} parent=1 // pred_check
      _
    $region23: #{tpu_custom_call.1} parent=1 // pred_check_branch
      %428 = sbr.rel (0) target = $region25
    $region24: #{tpu_custom_call.1} parent=1 // pred_region
      %430 = vsyncadd [#allocation7], 0
      %s432 = sshll.u32 %s2, 4
      %s433 = int_to_ptr.hbm [resolvable:$true] %s432
      %435 = dma.smem_to_hbm [#allocation8], 16, %s433, [#allocation7]
    $region25: #{tpu_custom_call.1} parent=1 // pred_fallthru
      _
    // Predicated region
    $region26: #{tpu_custom_call.1} parent=1 // pred_check
      _
    $region27: #{tpu_custom_call.1} parent=1 // pred_check_branch
      %437 = sbr.rel (0) target = $region29
    $region28: #{tpu_custom_call.1} parent=1 // pred_region
      %439 = dma.done [#allocation7], 16
    $region29: #{tpu_custom_call.1} parent=1 // pred_fallthru
      _
    %440 = sfence
    %441 = vsyncpa [#allocation6], 1
    %442 = vsyncpa [#allocation7], 1

</llo_original>
